<compile_context>
chip_gen: v7x
topology: tpu7x:2x2x1
jax: 0.10.0
libtpu: 0.0.40
codegen_flags: <defaults>
</compile_context>

<pallas_src>
import jax
import jax.numpy as jnp
from jax.experimental import pallas as pl
from jax.experimental.pallas import tpu as pltpu


def _round_up(x, m):
    return ((x + m - 1) // m) * m


def critic_kernel(x_ref, w1_ref, b1_ref, w2_ref, b2_ref, wq_ref, bq_ref, out_ref):
    # x_ref: [TB, d_in] bf16, weights bf16, biases f32, out [TB, 128] f32.
    x = x_ref[...]

    # fc1 (single merged matmul replaces the old s@W1s + a@W1a split)
    h1 = jnp.dot(x, w1_ref[...], preferred_element_type=jnp.float32) + b1_ref[...]
    h1 = jnp.maximum(h1, 0.0).astype(jnp.bfloat16)

    # fc2
    h2 = jnp.dot(h1, w2_ref[...], preferred_element_type=jnp.float32) + b2_ref[...]
    h2 = jnp.maximum(h2, 0.0).astype(jnp.bfloat16)

    # q head: wq is padded to 128 output lanes (col 0 real, cols 1..127 zero)
    # so the store is lane-dense / unmasked. bq scalar comes from SMEM.
    q = jnp.dot(h2, wq_ref[...], preferred_element_type=jnp.float32)
    out_ref[...] = q + bq_ref[0, 0]


def critic_forward(state, action, params, *, batch_tile=128):
    # batch_tile: 128 is a good default for v5e; 256 also works well on v6e/v7x.
    B = state.shape[0]
    x = jnp.concatenate([state, action], axis=1).astype(jnp.bfloat16)  # [B, d_in]
    d_in = x.shape[1]

    w1, b1 = params["w1"], params["b1"]
    w2, b2 = params["w2"], params["b2"]
    wq, bq = params["wq"], params["bq"]
    q_pad = wq.shape[1]  # 128 (lane-dense output width)

    # Batch tiling: tile is a multiple of 8 (sublane); pad B up to a tile multiple.
    tb = min(batch_tile, _round_up(B, 8))
    Bp = _round_up(B, tb)
    if Bp != B:
        x = jnp.pad(x, ((0, Bp - B), (0, 0)))
    grid = (Bp // tb,)

    def const_spec(shape):
        # Weights/biases stay VMEM-resident across batch tiles.
        return pl.BlockSpec(shape, lambda i: tuple(0 for _ in shape))

    out = pl.pallas_call(
        critic_kernel,
        out_shape=jax.ShapeDtypeStruct((Bp, q_pad), jnp.float32),
        grid=grid,
        in_specs=[
            pl.BlockSpec((tb, d_in), lambda i: (i, 0)),      # x tiles (pipelined)
            const_spec(w1.shape), const_spec(b1.shape),
            const_spec(w2.shape), const_spec(b2.shape),
            const_spec(wq.shape),
            pl.BlockSpec(memory_space=pltpu.MemorySpace.SMEM),  # bq scalar
        ],
        out_specs=pl.BlockSpec((tb, q_pad), lambda i: (i, 0)),
        compiler_params=pltpu.CompilerParams(
            dimension_semantics=("parallel",),   # v7x: split batch tiles over 2 TCs
            vmem_limit_bytes=4 << 20,            # actual footprint ~1 MiB
        ),
    )(x, w1, b1, w2, b2, wq, bq)

    return out[:B, :1]  # drop batch padding and the 127 zero output lanes


def init_params(key, input_dim, n_actions, fc1_dims=400, fc2_dims=300,
                fc1_pad=512, fc2_pad=384, q_pad=128):
    # Deterministic synthetic init mimicking nn.Linear's U(-1/sqrt(fan_in), 1/sqrt(fan_in)).
    # Weights stored [in, out] (transposed vs torch's [out, in]) and zero-padded to
    # lane-friendly sizes; padded rows/cols are zero so the forward value is unchanged.
    ks = jax.random.split(key, 6)
    d_in = input_dim + n_actions

    def u(k, shape, fan_in):
        bound = 1.0 / (float(fan_in) ** 0.5)
        return jax.random.uniform(k, shape, jnp.float32, -bound, bound)

    w1 = u(ks[0], (d_in, fc1_dims), d_in)
    b1 = u(ks[1], (1, fc1_dims), d_in)
    w2 = u(ks[2], (fc1_dims, fc2_dims), fc1_dims)
    b2 = u(ks[3], (1, fc2_dims), fc1_dims)
    wq = u(ks[4], (fc2_dims, 1), fc2_dims)
    bq = u(ks[5], (1, 1), fc2_dims)

    w1p = jnp.zeros((d_in, fc1_pad), jnp.float32).at[:, :fc1_dims].set(w1)
    b1p = jnp.zeros((1, fc1_pad), jnp.float32).at[:, :fc1_dims].set(b1)
    w2p = jnp.zeros((fc1_pad, fc2_pad), jnp.float32).at[:fc1_dims, :fc2_dims].set(w2)
    b2p = jnp.zeros((1, fc2_pad), jnp.float32).at[:, :fc2_dims].set(b2)
    wqp = jnp.zeros((fc2_pad, q_pad), jnp.float32).at[:fc2_dims, :1].set(wq)

    return {
        "w1": w1p.astype(jnp.bfloat16), "b1": b1p,
        "w2": w2p.astype(jnp.bfloat16), "b2": b2p,
        "wq": wqp.astype(jnp.bfloat16), "bq": bq,
        # unpadded f32 copies, only for the reference check below
        "_ref": {"w1": w1, "b1": b1, "w2": w2, "b2": b2, "wq": wq, "bq": bq},
    }


def reference_forward_bf16(state, action, params):
    # Same numerics as the kernel (bf16 operands, f32 accumulation).
    x = jnp.concatenate([state, action], axis=1).astype(jnp.bfloat16)
    h1 = jnp.dot(x, params["w1"], preferred_element_type=jnp.float32) + params["b1"]
    h1 = jnp.maximum(h1, 0.0).astype(jnp.bfloat16)
    h2 = jnp.dot(h1, params["w2"], preferred_element_type=jnp.float32) + params["b2"]
    h2 = jnp.maximum(h2, 0.0).astype(jnp.bfloat16)
    q = jnp.dot(h2, params["wq"], preferred_element_type=jnp.float32)
    return q[:, :1] + params["bq"]


def reference_forward_f32(state, action, ref):
    # Full-precision PyTorch-equivalent forward (unpadded weights).
    x = jnp.concatenate([state, action], axis=1)
    h1 = jnp.maximum(x @ ref["w1"] + ref["b1"], 0.0)
    h2 = jnp.maximum(h1 @ ref["w2"] + ref["b2"], 0.0)
    return h2 @ ref["wq"] + ref["bq"]


if __name__ == "__main__":
    key = jax.random.PRNGKey(0)
    k_s, k_a, k_p = jax.random.split(key, 3)

    B = 8              # batch
    INPUT_DIM = 16     # input_dims[0]
    N_ACTIONS = 4      # n_actions

    state = jax.random.normal(k_s, (B, INPUT_DIM), jnp.float32)
    action = jax.random.normal(k_a, (B, N_ACTIONS), jnp.float32)
    params = init_params(k_p, INPUT_DIM, N_ACTIONS)

    q = critic_forward(state, action, params)
    jax.block_until_ready(q)
    assert q.shape == (B, 1)

    # Bit-level sanity: same bf16/f32-acc numerics as the kernel.
    q_bf16 = reference_forward_bf16(state, action, params)
    assert jnp.allclose(q, q_bf16, atol=5e-3, rtol=5e-3), "mismatch vs bf16 reference"

    # Semantic check vs the full-precision PyTorch-equivalent forward.
    q_f32 = reference_forward_f32(state, action, params["_ref"])
    assert jnp.allclose(q, q_f32, atol=5e-2, rtol=5e-2), "mismatch vs f32 reference"

    print("KERNEL_OK")
</pallas_src>

<mosaic_0001>
module attributes {stable_mosaic.version = 11 : i64} {
  func.func @critic_kernel(%arg0: i32, %arg1: memref<8x20xbf16, #tpu.memory_space<vmem>>, %arg2: memref<20x512xbf16, #tpu.memory_space<vmem>>, %arg3: memref<1x512xf32, #tpu.memory_space<vmem>>, %arg4: memref<512x384xbf16, #tpu.memory_space<vmem>>, %arg5: memref<1x384xf32, #tpu.memory_space<vmem>>, %arg6: memref<384x128xbf16, #tpu.memory_space<vmem>>, %arg7: memref<1x1xf32, #tpu.memory_space<smem>>, %arg8: memref<8x128xf32, #tpu.memory_space<vmem>>) attributes {dimension_semantics = [#tpu.dimension_semantics<parallel>], iteration_bounds = array<i64: 1>, scalar_prefetch = 0 : i64, scratch_operands = 0 : i64, tpu.core_type = #tpu.core_type<tc>, window_params = [{transform_indices = @transform_0, window_bounds = array<i64: 8, 20>}, {pipeline_mode = #tpu.pipeline_mode<synchronous>, transform_indices = @transform_1, window_bounds = array<i64: 20, 512>}, {pipeline_mode = #tpu.pipeline_mode<synchronous>, transform_indices = @transform_2, window_bounds = array<i64: 1, 512>}, {pipeline_mode = #tpu.pipeline_mode<synchronous>, transform_indices = @transform_3, window_bounds = array<i64: 512, 384>}, {pipeline_mode = #tpu.pipeline_mode<synchronous>, transform_indices = @transform_4, window_bounds = array<i64: 1, 384>}, {pipeline_mode = #tpu.pipeline_mode<synchronous>, transform_indices = @transform_5, window_bounds = array<i64: 384, 128>}, {transform_indices = @transform_6, window_bounds = array<i64: 1, 1>}, {transform_indices = @transform_7, window_bounds = array<i64: 8, 128>}]} {
    %c0 = arith.constant 0 : index
    %c0_0 = arith.constant 0 : index
    %0 = vector.load %arg1[%c0, %c0_0] : memref<8x20xbf16, #tpu.memory_space<vmem>>, vector<8x20xbf16>
    %c0_1 = arith.constant 0 : index
    %c0_2 = arith.constant 0 : index
    %1 = vector.load %arg2[%c0_1, %c0_2] : memref<20x512xbf16, #tpu.memory_space<vmem>>, vector<20x512xbf16>
    %cst = arith.constant dense<0.000000e+00> : vector<8x512xf32>
    %2 = tpu.matmul %0, %1, %cst {dimension_numbers = #tpu.dot_dimension_numbers<[1], [0], [0], [1], [0, 0, 1, 1], [], []>} : vector<8x20xbf16>, vector<20x512xbf16>, vector<8x512xf32> -> vector<8x512xf32>
    %c0_3 = arith.constant 0 : index
    %c0_4 = arith.constant 0 : index
    %3 = vector.load %arg3[%c0_3, %c0_4] : memref<1x512xf32, #tpu.memory_space<vmem>>, vector<1x512xf32>
    %4 = vector.broadcast %3 : vector<1x512xf32> to vector<8x512xf32>
    %5 = arith.addf %2, %4 : vector<8x512xf32>
    %cst_5 = arith.constant 0.000000e+00 : f32
    %6 = vector.broadcast %cst_5 : f32 to vector<8x512xf32>
    %7 = arith.maximumf %5, %6 : vector<8x512xf32>
    %8 = arith.truncf %7 : vector<8x512xf32> to vector<8x512xbf16>
    %c0_6 = arith.constant 0 : index
    %c0_7 = arith.constant 0 : index
    %9 = vector.load %arg4[%c0_6, %c0_7] : memref<512x384xbf16, #tpu.memory_space<vmem>>, vector<512x384xbf16>
    %cst_8 = arith.constant dense<0.000000e+00> : vector<8x384xf32>
    %10 = tpu.matmul %8, %9, %cst_8 {dimension_numbers = #tpu.dot_dimension_numbers<[1], [0], [0], [1], [0, 0, 1, 1], [], []>} : vector<8x512xbf16>, vector<512x384xbf16>, vector<8x384xf32> -> vector<8x384xf32>
    %c0_9 = arith.constant 0 : index
    %c0_10 = arith.constant 0 : index
    %11 = vector.load %arg5[%c0_9, %c0_10] : memref<1x384xf32, #tpu.memory_space<vmem>>, vector<1x384xf32>
    %12 = vector.broadcast %11 : vector<1x384xf32> to vector<8x384xf32>
    %13 = arith.addf %10, %12 : vector<8x384xf32>
    %cst_11 = arith.constant 0.000000e+00 : f32
    %14 = vector.broadcast %cst_11 : f32 to vector<8x384xf32>
    %15 = arith.maximumf %13, %14 : vector<8x384xf32>
    %16 = arith.truncf %15 : vector<8x384xf32> to vector<8x384xbf16>
    %c0_12 = arith.constant 0 : index
    %c0_13 = arith.constant 0 : index
    %17 = vector.load %arg6[%c0_12, %c0_13] : memref<384x128xbf16, #tpu.memory_space<vmem>>, vector<384x128xbf16>
    %cst_14 = arith.constant dense<0.000000e+00> : vector<8x128xf32>
    %18 = tpu.matmul %16, %17, %cst_14 {dimension_numbers = #tpu.dot_dimension_numbers<[1], [0], [0], [1], [0, 0, 1, 1], [], []>} : vector<8x384xbf16>, vector<384x128xbf16>, vector<8x128xf32> -> vector<8x128xf32>
    %c0_15 = arith.constant 0 : index
    %c0_16 = arith.constant 0 : index
    %19 = memref.load %arg7[%c0_15, %c0_16] : memref<1x1xf32, #tpu.memory_space<smem>>
    %20 = vector.broadcast %19 : f32 to vector<8x128xf32>
    %21 = arith.addf %18, %20 : vector<8x128xf32>
    %c0_17 = arith.constant 0 : index
    %c0_18 = arith.constant 0 : index
    %22 = vector.load %arg8[%c0_17, %c0_18] : memref<8x128xf32, #tpu.memory_space<vmem>>, vector<8x128xf32>
    tpu.vector_store %arg8[%c0_17, %c0_18], %21 {strides = array<i32>} : memref<8x128xf32, #tpu.memory_space<vmem>>, vector<8x128xf32>,
    return
  }
  func.func @transform_0(%arg0: i32) -> (i32, i32) {
    %c0_i32 = arith.constant 0 : i32
    %c0_i32_0 = arith.constant 0 : i32
    return %arg0, %c0_i32 : i32, i32
  }
  func.func @transform_1(%arg0: i32) -> (i32, i32) {
    %c0_i32 = arith.constant 0 : i32
    %c0_i32_0 = arith.constant 0 : i32
    %c0_i32_1 = arith.constant 0 : i32
    return %c0_i32, %c0_i32_0 : i32, i32
  }
  func.func @transform_2(%arg0: i32) -> (i32, i32) {
    %c0_i32 = arith.constant 0 : i32
    %c0_i32_0 = arith.constant 0 : i32
    %c0_i32_1 = arith.constant 0 : i32
    return %c0_i32, %c0_i32_0 : i32, i32
  }
  func.func @transform_3(%arg0: i32) -> (i32, i32) {
    %c0_i32 = arith.constant 0 : i32
    %c0_i32_0 = arith.constant 0 : i32
    %c0_i32_1 = arith.constant 0 : i32
    return %c0_i32, %c0_i32_0 : i32, i32
  }
  func.func @transform_4(%arg0: i32) -> (i32, i32) {
    %c0_i32 = arith.constant 0 : i32
    %c0_i32_0 = arith.constant 0 : i32
    %c0_i32_1 = arith.constant 0 : i32
    return %c0_i32, %c0_i32_0 : i32, i32
  }
  func.func @transform_5(%arg0: i32) -> (i32, i32) {
    %c0_i32 = arith.constant 0 : i32
    %c0_i32_0 = arith.constant 0 : i32
    %c0_i32_1 = arith.constant 0 : i32
    return %c0_i32, %c0_i32_0 : i32, i32
  }
  func.func @transform_6(%arg0: i32) -> (i32, i32) {
    %c0_i32 = arith.constant 0 : i32
    %c0_i32_0 = arith.constant 0 : i32
    %c0_i32_1 = arith.constant 0 : i32
    return %c0_i32, %c0_i32_0 : i32, i32
  }
  func.func @transform_7(%arg0: i32) -> (i32, i32) {
    %c0_i32 = arith.constant 0 : i32
    %c0_i32_0 = arith.constant 0 : i32
    return %arg0, %c0_i32 : i32, i32
  }
}

</mosaic_0001>

<llo_original>
// kernel: tpu_custom_call.1
$region0: #{tpu_custom_call.1}
  #allocation0 [shape = 'u32[]', space=smem, size = 0x4, offset = 0x4, fixed_abs, tag = 'smem constant byte address 0x4 - core index']
  #allocation1 [shape = 'u32[144,128]{1,0:T(1,128)}', space=vmem, size = 0x12000, scoped, tag = 'internal scratch']
  #allocation2 [shape = 'f32[1,1]{1,0:T(1,128)S(6)}', space=smem, size = 0x200, scoped, tag = 'scoped memory for tpu_custom_call.1']
  %s0 = inlined_call_operand.hbm [shape: bf16[8,20], index: 0, kind: input, shape index: {}]
  %s1 = inlined_call_operand.hbm [shape: bf16[20,512], index: 1, kind: input, shape index: {}]
  %s2 = inlined_call_operand.vmem [shape: f32[1,512], index: 2, kind: input, shape index: {}]
  %s3 = inlined_call_operand.hbm [shape: bf16[512,384], index: 3, kind: input, shape index: {}]
  %s4 = inlined_call_operand.vmem [shape: f32[1,384], index: 4, kind: input, shape index: {}]
  %s5 = inlined_call_operand.hbm [shape: bf16[384,128], index: 5, kind: input, shape index: {}]
  %s6 = inlined_call_operand.<no memory space> [shape: f32[1,1], index: 6, kind: input, shape index: {}]
  %s7 = inlined_call_operand.hbm [shape: f32[8,128], index: 7, kind: output, shape index: {}]
  %s8 = sld [smem:[#allocation0]]
  $region54: #{tpu_custom_call.1} parent=0
    _
  %s10 = ssub.s32 1, %s8
  %s11 = scalar_select 0, %s10, %s8
  %12 = sst [smem:[#allocation2]] %s6
  $region1: #{tpu_custom_call.1} parent=0
    #allocation3 [shape = 'u8[2048]{0}', space=vmem, size = 0x800, scoped, tag = 'input window, operand 0, single buffered']
    #allocation4 [shape = 's32[1]{0}', space=sflag, size = 0x4, scoped, tag = 'scoped memory for tpu_custom_call.1']
    #allocation5 [shape = 's32[1]{0}', space=sflag, size = 0x4, scoped, tag = 'scoped memory for tpu_custom_call.1']
    #allocation6 [shape = 'u8[24576]{0}', space=vmem, size = 0x6000, scoped, tag = 'input window, operand 1, single buffered']
    #allocation7 [shape = 's32[1]{0}', space=sflag, size = 0x4, scoped, tag = 'scoped memory for tpu_custom_call.1']
    #allocation8 [shape = 'u8[393216]{0}', space=vmem, size = 0x60000, scoped, tag = 'input window, operand 3, single buffered']
    #allocation9 [shape = 'u8[98304]{0}', space=vmem, size = 0x18000, scoped, tag = 'input window, operand 5, single buffered']
    #allocation10 [shape = 's32[1]{0}', space=sflag, size = 0x4, scoped, tag = 'scoped memory for tpu_custom_call.1']
    #allocation11 [shape = 'u8[4096]{0}', space=vmem, size = 0x1000, scoped, tag = 'output window, operand 0, single buffered']
    %13 = vsyncpa [#allocation4], 0
    %14 = vsyncpa [#allocation7], 0
    %15 = vsyncpa [#allocation10], 0
    %16 = vsyncpa [#allocation5], 0
    // Predicated region
    $region2: #{tpu_custom_call.1} parent=1 // pred_check
      _
    $region3: #{tpu_custom_call.1} parent=1 // pred_check_branch
      %18 = sbr.rel (0) target = $region5
    $region4: #{tpu_custom_call.1} parent=1 // pred_region
      %s20 = ssub.s32 64, 64
      %21 = vsyncadd [#allocation4], %s20
      %s23 = sshll.u32 [#allocation3], 4
      %s24 = int_to_ptr.vmem [resolvable:$true] %s23
      %26 = dma.hbm_to_vmem [thread:$0]  %s0, 64, %s24, [#allocation4]
    $region5: #{tpu_custom_call.1} parent=1 // pred_fallthru
      _
    // Predicated region
    $region6: #{tpu_custom_call.1} parent=1 // pred_check
      _
    $region7: #{tpu_custom_call.1} parent=1 // pred_check_branch
      %28 = sbr.rel (0) target = $region9
    $region8: #{tpu_custom_call.1} parent=1 // pred_region
      %s30 = ssub.s32 768, 768
      %31 = vsyncadd [#allocation7], %s30
      %s32 = sshll.u32 [#allocation6], 4
      %s33 = int_to_ptr.vmem [resolvable:$true] %s32
      %38 = dma.hbm_to_vmem [thread:$0]  %s1, 768, %s33, [#allocation7], 256, 256, 16
    $region9: #{tpu_custom_call.1} parent=1 // pred_fallthru
      _
    // Predicated region
    $region10: #{tpu_custom_call.1} parent=1 // pred_check
      _
    $region11: #{tpu_custom_call.1} parent=1 // pred_check_branch
      %40 = sbr.rel (0) target = $region13
    $region12: #{tpu_custom_call.1} parent=1 // pred_region
      _
    $region13: #{tpu_custom_call.1} parent=1 // pred_fallthru
      _
    // Predicated region
    $region14: #{tpu_custom_call.1} parent=1 // pred_check
      _
    $region15: #{tpu_custom_call.1} parent=1 // pred_check_branch
      %42 = sbr.rel (0) target = $region17
    $region16: #{tpu_custom_call.1} parent=1 // pred_region
      %s44 = ssub.s32 12288, 12288
      %45 = vsyncadd [#allocation7], %s44
      %s46 = sshll.u32 [#allocation8], 4
      %s47 = int_to_ptr.vmem [resolvable:$true] %s46
      %52 = dma.hbm_to_vmem [thread:$0]  %s3, 12288, %s47, [#allocation7], 192, 192, 12
    $region17: #{tpu_custom_call.1} parent=1 // pred_fallthru
      _
    // Predicated region
    $region18: #{tpu_custom_call.1} parent=1 // pred_check
      _
    $region19: #{tpu_custom_call.1} parent=1 // pred_check_branch
      %54 = sbr.rel (0) target = $region21
    $region20: #{tpu_custom_call.1} parent=1 // pred_region
      _
    $region21: #{tpu_custom_call.1} parent=1 // pred_fallthru
      _
    // Predicated region
    $region22: #{tpu_custom_call.1} parent=1 // pred_check
      _
    $region23: #{tpu_custom_call.1} parent=1 // pred_check_branch
      %56 = sbr.rel (0) target = $region25
    $region24: #{tpu_custom_call.1} parent=1 // pred_region
      %s58 = ssub.s32 3072, 3072
      %59 = vsyncadd [#allocation10], %s58
      %s60 = sshll.u32 [#allocation9], 4
      %s61 = int_to_ptr.vmem [resolvable:$true] %s60
      %66 = dma.hbm_to_vmem [thread:$0]  %s5, 3072, %s61, [#allocation10], 64, 64, 4
    $region25: #{tpu_custom_call.1} parent=1 // pred_fallthru
      _
    // Predicated region
    $region26: #{tpu_custom_call.1} parent=1 // pred_check
      _
    $region27: #{tpu_custom_call.1} parent=1 // pred_check_branch
      %68 = sbr.rel (0) target = $region29
    $region28: #{tpu_custom_call.1} parent=1 // pred_region
      _
    $region29: #{tpu_custom_call.1} parent=1 // pred_fallthru
      _
    // Predicated region
    $region30: #{tpu_custom_call.1} parent=1 // pred_check
      _
    $region31: #{tpu_custom_call.1} parent=1 // pred_check_branch
      %70 = sbr.rel (0) target = $region33
    $region32: #{tpu_custom_call.1} parent=1 // pred_region
      %71 = dma.done [#allocation4], 64
    $region33: #{tpu_custom_call.1} parent=1 // pred_fallthru
      _
    // Predicated region
    $region34: #{tpu_custom_call.1} parent=1 // pred_check
      _
    $region35: #{tpu_custom_call.1} parent=1 // pred_check_branch
      %73 = sbr.rel (0) target = $region37
    $region36: #{tpu_custom_call.1} parent=1 // pred_region
      %74 = dma.done [#allocation7], 768
    $region37: #{tpu_custom_call.1} parent=1 // pred_fallthru
      _
    // Predicated region
    $region38: #{tpu_custom_call.1} parent=1 // pred_check
      _
    $region39: #{tpu_custom_call.1} parent=1 // pred_check_branch
      %76 = sbr.rel (0) target = $region41
    $region40: #{tpu_custom_call.1} parent=1 // pred_region
      %77 = dma.done [#allocation7], 12288
    $region41: #{tpu_custom_call.1} parent=1 // pred_fallthru
      _
    // Predicated region
    $region42: #{tpu_custom_call.1} parent=1 // pred_check
      _
    $region43: #{tpu_custom_call.1} parent=1 // pred_check_branch
      %79 = sbr.rel (0) target = $region45
    $region44: #{tpu_custom_call.1} parent=1 // pred_region
      %80 = dma.done [#allocation10], 3072
    $region45: #{tpu_custom_call.1} parent=1 // pred_fallthru
      _
    %v82 = vld [vmem:[#allocation3] sm:$0xf]
    %v83 = vld [vmem:[#allocation6] sm:$0xff]
    %v84 = vld [vmem:[#allocation6 + $0x8] sm:$0xff]
    %v85 = vld [vmem:[#allocation6 + $0x10] sm:$0xff]
    %v86 = vld [vmem:[#allocation6 + $0x18] sm:$0xff]
    %v87 = vld [vmem:[#allocation6 + $0x20] sm:$0x33]
    %v88 = vld [vmem:[#allocation6 + $0x28] sm:$0x33]
    %v89 = vld [vmem:[%s2] sm:$0xf]
    %v91 = vlaneseq
    %v92 = vshrl.u32 %v91, 7
    %v93 = vsub.s32 0, %v92
    %v94 = vrot.slane %v89, %v93
    %v95 = vlaneseq
    %v96 = vshrl.u32 %v95, 7
    %v97 = vsub.s32 1, %v96
    %v98 = vrot.slane %v89, %v97
    %v99 = vlaneseq
    %v100 = vshrl.u32 %v99, 7
    %v101 = vsub.s32 2, %v100
    %v102 = vrot.slane %v89, %v101
    %v103 = vlaneseq
    %v104 = vshrl.u32 %v103, 7
    %v105 = vsub.s32 3, %v104
    %v106 = vrot.slane %v89, %v105
    %v117 = vunpack.c.l.b16 %v83
    %v118 = vunpack.c.h.b16 %v83
    %v119 = vunpack.c.l.b16 %v84
    %v120 = vunpack.c.h.b16 %v84
    %v121 = vunpack.c.l.b16 %v85
    %v122 = vunpack.c.h.b16 %v85
    %v123 = vunpack.c.l.b16 %v86
    %v124 = vunpack.c.h.b16 %v86
    %v125 = vunpack.c.l.b16 %v87
    %v126 = vunpack.c.h.b16 %v87
    %v127 = vunpack.c.l.b16 %v88
    %v128 = vunpack.c.h.b16 %v88
    %v129 = vpack.c.b16 %v121, %v117
    %v130 = vpack.c.b16 %v122, %v118
    %v131 = vpack.c.b16 %v123, %v119
    %v132 = vpack.c.b16 %v124, %v120
    %v133 = vpack.c.b16 %v125, %v125
    %v134 = vpack.c.b16 %v126, %v126
    %v135 = vpack.c.b16 %v127, %v127
    %v136 = vpack.c.b16 %v128, %v128
    %vm141 = vcmask 162816
    %v143 = vsel %vm141, %v82, 0
    %vm145 = vcmask 1041408
    %v147 = vsel %vm145, %v133, 0
    %v150 = vsel %vm145, %v134, 0
    %v153 = vsel %vm145, %v135, 0
    %v156 = vsel %vm145, %v136, 0
    %158 = vmatprep.subr.bf16.mxu0 %v130
    %159 = vmatpush1.bf16.msra.mxu0 %v129
    %160 = vmatprep.subr.bf16.mxu0 %v150
    %161 = vmatpush1.bf16.msra.mxu0 %v147
    %162 = vmatprep.subr.bf16.mxu0 0
    %163 = vmatpush1.bf16.msra.mxu0 0
    %164 = vmatprep.subr.bf16.mxu0 0
    %165 = vmatpush1.bf16.msra.mxu0 0
    %166 = vmatprep.subr.bf16.mxu0 0
    %167 = vmatpush1.bf16.msra.mxu0 0
    %168 = vmatprep.subr.bf16.mxu0 0
    %169 = vmatpush1.bf16.msra.mxu0 0
    %170 = vmatprep.subr.bf16.mxu0 0
    %171 = vmatpush1.bf16.msra.mxu0 0
    %172 = vmatprep.subr.bf16.mxu0 0
    %173 = vmatpush1.bf16.msra.mxu0 0
    %174 = vmatprep.subr.bf16.mxu0 0
    %175 = vmatpush1.bf16.msra.mxu0 0
    %176 = vmatprep.subr.bf16.mxu0 0
    %177 = vmatpush1.bf16.msra.mxu0 0
    %178 = vmatprep.subr.bf16.mxu0 0
    %179 = vmatpush1.bf16.msra.mxu0 0
    %180 = vmatprep.subr.bf16.mxu0 0
    %181 = vmatpush1.bf16.msra.mxu0 0
    %182 = vmatprep.subr.bf16.mxu0 0
    %183 = vmatpush1.bf16.msra.mxu0 0
    %184 = vmatprep.subr.bf16.mxu0 0
    %185 = vmatpush1.bf16.msra.mxu0 0
    %186 = vmatprep.subr.bf16.mxu0 0
    %187 = vmatpush1.bf16.msra.mxu0 0
    %188 = vmatprep.subr.bf16.mxu0 0
    %189 = vmatpush1.bf16.msra.mxu0 0
    %190 = vmatprep.mubr.bf16.mxu0 0
    %191 = vmatmul.mubr.bf16.gmra.mrb[0].mxu0 %v143
    %v192 = vpop.f32.mrb[0].mxu0
    %v193 = vadd.f32 %v94, %v192
    %v194 = vpop.f32.mrb[0].mxu0
    %v195 = vadd.f32 %v98, %v194
    %v196 = vpop.f32.mrb[0].mxu0
    %v197 = vpop.f32.mrb[0].mxu0
    %198 = vdwg.mxu0
    %199 = vmatprep.subr.bf16.mxu0 %v132
    %200 = vmatpush1.bf16.msra.mxu0 %v131
    %201 = vmatprep.subr.bf16.mxu0 %v156
    %202 = vmatpush1.bf16.msra.mxu0 %v153
    %203 = vmatprep.subr.bf16.mxu0 0
    %204 = vmatpush1.bf16.msra.mxu0 0
    %205 = vmatprep.subr.bf16.mxu0 0
    %206 = vmatpush1.bf16.msra.mxu0 0
    %207 = vmatprep.subr.bf16.mxu0 0
    %208 = vmatpush1.bf16.msra.mxu0 0
    %209 = vmatprep.subr.bf16.mxu0 0
    %210 = vmatpush1.bf16.msra.mxu0 0
    %211 = vmatprep.subr.bf16.mxu0 0
    %212 = vmatpush1.bf16.msra.mxu0 0
    %213 = vmatprep.subr.bf16.mxu0 0
    %214 = vmatpush1.bf16.msra.mxu0 0
    %215 = vmatprep.subr.bf16.mxu0 0
    %216 = vmatpush1.bf16.msra.mxu0 0
    %217 = vmatprep.subr.bf16.mxu0 0
    %218 = vmatpush1.bf16.msra.mxu0 0
    %219 = vmatprep.subr.bf16.mxu0 0
    %220 = vmatpush1.bf16.msra.mxu0 0
    %221 = vmatprep.subr.bf16.mxu0 0
    %222 = vmatpush1.bf16.msra.mxu0 0
    %223 = vmatprep.subr.bf16.mxu0 0
    %224 = vmatpush1.bf16.msra.mxu0 0
    %225 = vmatprep.subr.bf16.mxu0 0
    %226 = vmatpush1.bf16.msra.mxu0 0
    %227 = vmatprep.subr.bf16.mxu0 0
    %228 = vmatpush1.bf16.msra.mxu0 0
    %229 = vmatprep.subr.bf16.mxu0 0
    %230 = vmatpush1.bf16.msra.mxu0 0
    %231 = vmatprep.mubr.bf16.mxu0 0
    %232 = vmatmul.mubr.bf16.gmra.mrb[0].mxu0 %v143
    %v233 = vpop.f32.mrb[0].mxu0
    %v234 = vadd.f32 %v102, %v233
    %v235 = vpop.f32.mrb[0].mxu0
    %v236 = vadd.f32 %v106, %v235
    %v237 = vpop.f32.mrb[0].mxu0
    %v238 = vpop.f32.mrb[0].mxu0
    %239 = vdwg.mxu0
    %v240 = vmax.f32 %v193, 0.0
    %v241 = vmax.f32 %v195, 0.0
    %v242 = vmax.f32 %v234, 0.0
    %v243 = vmax.f32 %v236, 0.0
    %v244 = vpack.c.bf16 %v240, %v240
    %v245 = vpack.c.bf16 %v241, %v241
    %v246 = vpack.c.bf16 %v242, %v242
    %v247 = vpack.c.bf16 %v243, %v243
    %v248 = vld [vmem:[#allocation8] sm:$0xff]
    %v249 = vld [vmem:[#allocation8 + $0x8] sm:$0xf]
    %v250 = vld [vmem:[#allocation8 + $0xc] sm:$0xff]
    %v251 = vld [vmem:[#allocation8 + $0x14] sm:$0xf]
    %v252 = vld [vmem:[#allocation8 + $0x18] sm:$0xff]
    %v253 = vld [vmem:[#allocation8 + $0x20] sm:$0xf]
    %v254 = vld [vmem:[#allocation8 + $0x24] sm:$0xff]
    %v255 = vld [vmem:[#allocation8 + $0x2c] sm:$0xf]
    %v256 = vld [vmem:[#allocation8 + $0x30] sm:$0xff]
    %v257 = vld [vmem:[#allocation8 + $0x38] sm:$0xf]
    %v258 = vld [vmem:[#allocation8 + $0x3c] sm:$0xff]
    %v259 = vld [vmem:[#allocation8 + $0x44] sm:$0xf]
    %v260 = vld [vmem:[#allocation8 + $0x48] sm:$0xff]
    %v261 = vld [vmem:[#allocation8 + $0x50] sm:$0xf]
    %v262 = vld [vmem:[#allocation8 + $0x54] sm:$0xff]
    %v263 = vld [vmem:[#allocation8 + $0x5c] sm:$0xf]
    %v264 = vld [vmem:[#allocation8 + $0x60] sm:$0xff]
    %v265 = vld [vmem:[#allocation8 + $0x68] sm:$0xf]
    %v266 = vld [vmem:[#allocation8 + $0x6c] sm:$0xff]
    %v267 = vld [vmem:[#allocation8 + $0x74] sm:$0xf]
    %v268 = vld [vmem:[#allocation8 + $0x78] sm:$0xff]
    %v269 = vld [vmem:[#allocation8 + $0x80] sm:$0xf]
    %v270 = vld [vmem:[#allocation8 + $0x84] sm:$0xff]
    %v271 = vld [vmem:[#allocation8 + $0x8c] sm:$0xf]
    %v272 = vld [vmem:[#allocation8 + $0x90] sm:$0xff]
    %v273 = vld [vmem:[#allocation8 + $0x98] sm:$0xf]
    %v274 = vld [vmem:[#allocation8 + $0x9c] sm:$0xff]
    %v275 = vld [vmem:[#allocation8 + $0xa4] sm:$0xf]
    %v276 = vld [vmem:[#allocation8 + $0xa8] sm:$0xff]
    %v277 = vld [vmem:[#allocation8 + $0xb0] sm:$0xf]
    %v278 = vld [vmem:[#allocation8 + $0xb4] sm:$0xff]
    %v279 = vld [vmem:[#allocation8 + $0xbc] sm:$0xf]
    %v280 = vld [vmem:[#allocation8 + $0xc0] sm:$0xff]
    %v281 = vld [vmem:[#allocation8 + $0xc8] sm:$0xf]
    %v282 = vld [vmem:[#allocation8 + $0xcc] sm:$0xff]
    %v283 = vld [vmem:[#allocation8 + $0xd4] sm:$0xf]
    %v284 = vld [vmem:[#allocation8 + $0xd8] sm:$0xff]
    %v285 = vld [vmem:[#allocation8 + $0xe0] sm:$0xf]
    %v286 = vld [vmem:[#allocation8 + $0xe4] sm:$0xff]
    %v287 = vld [vmem:[#allocation8 + $0xec] sm:$0xf]
    %v288 = vld [vmem:[#allocation8 + $0xf0] sm:$0xff]
    %v289 = vld [vmem:[#allocation8 + $0xf8] sm:$0xf]
    %v290 = vld [vmem:[#allocation8 + $0xfc] sm:$0xff]
    %v291 = vld [vmem:[#allocation8 + $0x104] sm:$0xf]
    %v292 = vld [vmem:[#allocation8 + $0x108] sm:$0xff]
    %v293 = vld [vmem:[#allocation8 + $0x110] sm:$0xf]
    %v294 = vld [vmem:[#allocation8 + $0x114] sm:$0xff]
    %v295 = vld [vmem:[#allocation8 + $0x11c] sm:$0xf]
    %v296 = vld [vmem:[#allocation8 + $0x120] sm:$0xff]
    %v297 = vld [vmem:[#allocation8 + $0x128] sm:$0xf]
    %v298 = vld [vmem:[#allocation8 + $0x12c] sm:$0xff]
    %v299 = vld [vmem:[#allocation8 + $0x134] sm:$0xf]
    %v300 = vld [vmem:[#allocation8 + $0x138] sm:$0xff]
    %v301 = vld [vmem:[#allocation8 + $0x140] sm:$0xf]
    %v302 = vld [vmem:[#allocation8 + $0x144] sm:$0xff]
    %v303 = vld [vmem:[#allocation8 + $0x14c] sm:$0xf]
    %v304 = vld [vmem:[#allocation8 + $0x150] sm:$0xff]
    %v305 = vld [vmem:[#allocation8 + $0x158] sm:$0xf]
    %v306 = vld [vmem:[#allocation8 + $0x15c] sm:$0xff]
    %v307 = vld [vmem:[#allocation8 + $0x164] sm:$0xf]
    %v308 = vld [vmem:[#allocation8 + $0x168] sm:$0xff]
    %v309 = vld [vmem:[#allocation8 + $0x170] sm:$0xf]
    %v310 = vld [vmem:[#allocation8 + $0x174] sm:$0xff]
    %v311 = vld [vmem:[#allocation8 + $0x17c] sm:$0xf]
    %v312 = vld [vmem:[#allocation8 + $0x180] sm:$0xff]
    %v313 = vld [vmem:[#allocation8 + $0x188] sm:$0xf]
    %v314 = vld [vmem:[#allocation8 + $0x18c] sm:$0xff]
    %v315 = vld [vmem:[#allocation8 + $0x194] sm:$0xf]
    %v316 = vld [vmem:[#allocation8 + $0x198] sm:$0xff]
    %v317 = vld [vmem:[#allocation8 + $0x1a0] sm:$0xf]
    %v318 = vld [vmem:[#allocation8 + $0x1a4] sm:$0xff]
    %v319 = vld [vmem:[#allocation8 + $0x1ac] sm:$0xf]
    %v320 = vld [vmem:[#allocation8 + $0x1b0] sm:$0xff]
    %v321 = vld [vmem:[#allocation8 + $0x1b8] sm:$0xf]
    %v322 = vld [vmem:[#allocation8 + $0x1bc] sm:$0xff]
    %v323 = vld [vmem:[#allocation8 + $0x1c4] sm:$0xf]
    %v324 = vld [vmem:[#allocation8 + $0x1c8] sm:$0xff]
    %v325 = vld [vmem:[#allocation8 + $0x1d0] sm:$0xf]
    %v326 = vld [vmem:[#allocation8 + $0x1d4] sm:$0xff]
    %v327 = vld [vmem:[#allocation8 + $0x1dc] sm:$0xf]
    %v328 = vld [vmem:[#allocation8 + $0x1e0] sm:$0xff]
    %v329 = vld [vmem:[#allocation8 + $0x1e8] sm:$0xf]
    %v330 = vld [vmem:[#allocation8 + $0x1ec] sm:$0xff]
    %v331 = vld [vmem:[#allocation8 + $0x1f4] sm:$0xf]
    %v332 = vld [vmem:[#allocation8 + $0x1f8] sm:$0xff]
    %v333 = vld [vmem:[#allocation8 + $0x200] sm:$0xf]
    %v334 = vld [vmem:[#allocation8 + $0x204] sm:$0xff]
    %v335 = vld [vmem:[#allocation8 + $0x20c] sm:$0xf]
    %v336 = vld [vmem:[#allocation8 + $0x210] sm:$0xff]
    %v337 = vld [vmem:[#allocation8 + $0x218] sm:$0xf]
    %v338 = vld [vmem:[#allocation8 + $0x21c] sm:$0xff]
    %v339 = vld [vmem:[#allocation8 + $0x224] sm:$0xf]
    %v340 = vld [vmem:[#allocation8 + $0x228] sm:$0xff]
    %v341 = vld [vmem:[#allocation8 + $0x230] sm:$0xf]
    %v342 = vld [vmem:[#allocation8 + $0x234] sm:$0xff]
    %v343 = vld [vmem:[#allocation8 + $0x23c] sm:$0xf]
    %v344 = vld [vmem:[#allocation8 + $0x240] sm:$0xff]
    %v345 = vld [vmem:[#allocation8 + $0x248] sm:$0xf]
    %v346 = vld [vmem:[#allocation8 + $0x24c] sm:$0xff]
    %v347 = vld [vmem:[#allocation8 + $0x254] sm:$0xf]
    %v348 = vld [vmem:[#allocation8 + $0x258] sm:$0xff]
    %v349 = vld [vmem:[#allocation8 + $0x260] sm:$0xf]
    %v350 = vld [vmem:[#allocation8 + $0x264] sm:$0xff]
    %v351 = vld [vmem:[#allocation8 + $0x26c] sm:$0xf]
    %v352 = vld [vmem:[#allocation8 + $0x270] sm:$0xff]
    %v353 = vld [vmem:[#allocation8 + $0x278] sm:$0xf]
    %v354 = vld [vmem:[#allocation8 + $0x27c] sm:$0xff]
    %v355 = vld [vmem:[#allocation8 + $0x284] sm:$0xf]
    %v356 = vld [vmem:[#allocation8 + $0x288] sm:$0xff]
    %v357 = vld [vmem:[#allocation8 + $0x290] sm:$0xf]
    %v358 = vld [vmem:[#allocation8 + $0x294] sm:$0xff]
    %v359 = vld [vmem:[#allocation8 + $0x29c] sm:$0xf]
    %v360 = vld [vmem:[#allocation8 + $0x2a0] sm:$0xff]
    %v361 = vld [vmem:[#allocation8 + $0x2a8] sm:$0xf]
    %v362 = vld [vmem:[#allocation8 + $0x2ac] sm:$0xff]
    %v363 = vld [vmem:[#allocation8 + $0x2b4] sm:$0xf]
    %v364 = vld [vmem:[#allocation8 + $0x2b8] sm:$0xff]
    %v365 = vld [vmem:[#allocation8 + $0x2c0] sm:$0xf]
    %v366 = vld [vmem:[#allocation8 + $0x2c4] sm:$0xff]
    %v367 = vld [vmem:[#allocation8 + $0x2cc] sm:$0xf]
    %v368 = vld [vmem:[#allocation8 + $0x2d0] sm:$0xff]
    %v369 = vld [vmem:[#allocation8 + $0x2d8] sm:$0xf]
    %v370 = vld [vmem:[#allocation8 + $0x2dc] sm:$0xff]
    %v371 = vld [vmem:[#allocation8 + $0x2e4] sm:$0xf]
    %v372 = vld [vmem:[#allocation8 + $0x2e8] sm:$0xff]
    %v373 = vld [vmem:[#allocation8 + $0x2f0] sm:$0xf]
    %v374 = vld [vmem:[#allocation8 + $0x2f4] sm:$0xff]
    %v375 = vld [vmem:[#allocation8 + $0x2fc] sm:$0xf]
    %v376 = vld [vmem:[%s4] sm:$0x7]
    %v378 = vlaneseq
    %v379 = vshrl.u32 %v378, 7
    %v380 = vsub.s32 0, %v379
    %v381 = vrot.slane %v376, %v380
    %v382 = vlaneseq
    %v383 = vshrl.u32 %v382, 7
    %v384 = vsub.s32 1, %v383
    %v385 = vrot.slane %v376, %v384
    %v386 = vlaneseq
    %v387 = vshrl.u32 %v386, 7
    %v388 = vsub.s32 2, %v387
    %v389 = vrot.slane %v376, %v388
    %v521 = vunpack.c.l.b16 %v248
    %v522 = vunpack.c.h.b16 %v248
    %v523 = vunpack.c.l.b16 %v249
    %v524 = vunpack.c.l.b16 %v250
    %v525 = vunpack.c.h.b16 %v250
    %v526 = vunpack.c.l.b16 %v251
    %v527 = vunpack.c.l.b16 %v252
    %v528 = vunpack.c.h.b16 %v252
    %v529 = vunpack.c.l.b16 %v253
    %v530 = vunpack.c.l.b16 %v254
    %v531 = vunpack.c.h.b16 %v254
    %v532 = vunpack.c.l.b16 %v255
    %v533 = vunpack.c.l.b16 %v256
    %v534 = vunpack.c.h.b16 %v256
    %v535 = vunpack.c.l.b16 %v257
    %v536 = vunpack.c.l.b16 %v258
    %v537 = vunpack.c.h.b16 %v258
    %v538 = vunpack.c.l.b16 %v259
    %v539 = vunpack.c.l.b16 %v260
    %v540 = vunpack.c.h.b16 %v260
    %v541 = vunpack.c.l.b16 %v261
    %v542 = vunpack.c.l.b16 %v262
    %v543 = vunpack.c.h.b16 %v262
    %v544 = vunpack.c.l.b16 %v263
    %v545 = vunpack.c.l.b16 %v264
    %v546 = vunpack.c.h.b16 %v264
    %v547 = vunpack.c.l.b16 %v265
    %v548 = vunpack.c.l.b16 %v266
    %v549 = vunpack.c.h.b16 %v266
    %v550 = vunpack.c.l.b16 %v267
    %v551 = vunpack.c.l.b16 %v268
    %v552 = vunpack.c.h.b16 %v268
    %v553 = vunpack.c.l.b16 %v269
    %v554 = vunpack.c.l.b16 %v270
    %v555 = vunpack.c.h.b16 %v270
    %v556 = vunpack.c.l.b16 %v271
    %v557 = vunpack.c.l.b16 %v272
    %v558 = vunpack.c.h.b16 %v272
    %v559 = vunpack.c.l.b16 %v273
    %v560 = vunpack.c.l.b16 %v274
    %v561 = vunpack.c.h.b16 %v274
    %v562 = vunpack.c.l.b16 %v275
    %v563 = vunpack.c.l.b16 %v276
    %v564 = vunpack.c.h.b16 %v276
    %v565 = vunpack.c.l.b16 %v277
    %v566 = vunpack.c.l.b16 %v278
    %v567 = vunpack.c.h.b16 %v278
    %v568 = vunpack.c.l.b16 %v279
    %v569 = vunpack.c.l.b16 %v280
    %v570 = vunpack.c.h.b16 %v280
    %v571 = vunpack.c.l.b16 %v281
    %v572 = vunpack.c.l.b16 %v282
    %v573 = vunpack.c.h.b16 %v282
    %v574 = vunpack.c.l.b16 %v283
    %v575 = vunpack.c.l.b16 %v284
    %v576 = vunpack.c.h.b16 %v284
    %v577 = vunpack.c.l.b16 %v285
    %v578 = vunpack.c.l.b16 %v286
    %v579 = vunpack.c.h.b16 %v286
    %v580 = vunpack.c.l.b16 %v287
    %v581 = vunpack.c.l.b16 %v288
    %v582 = vunpack.c.h.b16 %v288
    %v583 = vunpack.c.l.b16 %v289
    %v584 = vunpack.c.l.b16 %v290
    %v585 = vunpack.c.h.b16 %v290
    %v586 = vunpack.c.l.b16 %v291
    %v587 = vunpack.c.l.b16 %v292
    %v588 = vunpack.c.h.b16 %v292
    %v589 = vunpack.c.l.b16 %v293
    %v590 = vunpack.c.l.b16 %v294
    %v591 = vunpack.c.h.b16 %v294
    %v592 = vunpack.c.l.b16 %v295
    %v593 = vunpack.c.l.b16 %v296
    %v594 = vunpack.c.h.b16 %v296
    %v595 = vunpack.c.l.b16 %v297
    %v596 = vunpack.c.l.b16 %v298
    %v597 = vunpack.c.h.b16 %v298
    %v598 = vunpack.c.l.b16 %v299
    %v599 = vunpack.c.l.b16 %v300
    %v600 = vunpack.c.h.b16 %v300
    %v601 = vunpack.c.l.b16 %v301
    %v602 = vunpack.c.l.b16 %v302
    %v603 = vunpack.c.h.b16 %v302
    %v604 = vunpack.c.l.b16 %v303
    %v605 = vunpack.c.l.b16 %v304
    %v606 = vunpack.c.h.b16 %v304
    %v607 = vunpack.c.l.b16 %v305
    %v608 = vunpack.c.l.b16 %v306
    %v609 = vunpack.c.h.b16 %v306
    %v610 = vunpack.c.l.b16 %v307
    %v611 = vunpack.c.l.b16 %v308
    %v612 = vunpack.c.h.b16 %v308
    %v613 = vunpack.c.l.b16 %v309
    %v614 = vunpack.c.l.b16 %v310
    %v615 = vunpack.c.h.b16 %v310
    %v616 = vunpack.c.l.b16 %v311
    %v617 = vunpack.c.l.b16 %v312
    %v618 = vunpack.c.h.b16 %v312
    %v619 = vunpack.c.l.b16 %v313
    %v620 = vunpack.c.l.b16 %v314
    %v621 = vunpack.c.h.b16 %v314
    %v622 = vunpack.c.l.b16 %v315
    %v623 = vunpack.c.l.b16 %v316
    %v624 = vunpack.c.h.b16 %v316
    %v625 = vunpack.c.l.b16 %v317
    %v626 = vunpack.c.l.b16 %v318
    %v627 = vunpack.c.h.b16 %v318
    %v628 = vunpack.c.l.b16 %v319
    %v629 = vunpack.c.l.b16 %v320
    %v630 = vunpack.c.h.b16 %v320
    %v631 = vunpack.c.l.b16 %v321
    %v632 = vunpack.c.l.b16 %v322
    %v633 = vunpack.c.h.b16 %v322
    %v634 = vunpack.c.l.b16 %v323
    %v635 = vunpack.c.l.b16 %v324
    %v636 = vunpack.c.h.b16 %v324
    %v637 = vunpack.c.l.b16 %v325
    %v638 = vunpack.c.l.b16 %v326
    %v639 = vunpack.c.h.b16 %v326
    %v640 = vunpack.c.l.b16 %v327
    %v641 = vunpack.c.l.b16 %v328
    %v642 = vunpack.c.h.b16 %v328
    %v643 = vunpack.c.l.b16 %v329
    %v644 = vunpack.c.l.b16 %v330
    %v645 = vunpack.c.h.b16 %v330
    %v646 = vunpack.c.l.b16 %v331
    %v647 = vunpack.c.l.b16 %v332
    %v648 = vunpack.c.h.b16 %v332
    %v649 = vunpack.c.l.b16 %v333
    %v650 = vunpack.c.l.b16 %v334
    %v651 = vunpack.c.h.b16 %v334
    %v652 = vunpack.c.l.b16 %v335
    %v653 = vunpack.c.l.b16 %v336
    %v654 = vunpack.c.h.b16 %v336
    %v655 = vunpack.c.l.b16 %v337
    %v656 = vunpack.c.l.b16 %v338
    %v657 = vunpack.c.h.b16 %v338
    %v658 = vunpack.c.l.b16 %v339
    %v659 = vunpack.c.l.b16 %v340
    %v660 = vunpack.c.h.b16 %v340
    %v661 = vunpack.c.l.b16 %v341
    %v662 = vunpack.c.l.b16 %v342
    %v663 = vunpack.c.h.b16 %v342
    %v664 = vunpack.c.l.b16 %v343
    %v665 = vunpack.c.l.b16 %v344
    %v666 = vunpack.c.h.b16 %v344
    %v667 = vunpack.c.l.b16 %v345
    %v668 = vunpack.c.l.b16 %v346
    %v669 = vunpack.c.h.b16 %v346
    %v670 = vunpack.c.l.b16 %v347
    %v671 = vunpack.c.l.b16 %v348
    %v672 = vunpack.c.h.b16 %v348
    %v673 = vunpack.c.l.b16 %v349
    %v674 = vunpack.c.l.b16 %v350
    %v675 = vunpack.c.h.b16 %v350
    %v676 = vunpack.c.l.b16 %v351
    %v677 = vunpack.c.l.b16 %v352
    %v678 = vunpack.c.h.b16 %v352
    %v679 = vunpack.c.l.b16 %v353
    %v680 = vunpack.c.l.b16 %v354
    %v681 = vunpack.c.h.b16 %v354
    %v682 = vunpack.c.l.b16 %v355
    %v683 = vunpack.c.l.b16 %v356
    %v684 = vunpack.c.h.b16 %v356
    %v685 = vunpack.c.l.b16 %v357
    %v686 = vunpack.c.l.b16 %v358
    %v687 = vunpack.c.h.b16 %v358
    %v688 = vunpack.c.l.b16 %v359
    %v689 = vunpack.c.l.b16 %v360
    %v690 = vunpack.c.h.b16 %v360
    %v691 = vunpack.c.l.b16 %v361
    %v692 = vunpack.c.l.b16 %v362
    %v693 = vunpack.c.h.b16 %v362
    %v694 = vunpack.c.l.b16 %v363
    %v695 = vunpack.c.l.b16 %v364
    %v696 = vunpack.c.h.b16 %v364
    %v697 = vunpack.c.l.b16 %v365
    %v698 = vunpack.c.l.b16 %v366
    %v699 = vunpack.c.h.b16 %v366
    %v700 = vunpack.c.l.b16 %v367
    %v701 = vunpack.c.l.b16 %v368
    %v702 = vunpack.c.h.b16 %v368
    %v703 = vunpack.c.l.b16 %v369
    %v704 = vunpack.c.l.b16 %v370
    %v705 = vunpack.c.h.b16 %v370
    %v706 = vunpack.c.l.b16 %v371
    %v707 = vunpack.c.l.b16 %v372
    %v708 = vunpack.c.h.b16 %v372
    %v709 = vunpack.c.l.b16 %v373
    %v710 = vunpack.c.l.b16 %v374
    %v711 = vunpack.c.h.b16 %v374
    %v712 = vunpack.c.l.b16 %v375
    %v713 = vpack.c.b16 %v524, %v521
    %v714 = vpack.c.b16 %v525, %v522
    %v715 = vpack.c.b16 %v526, %v523
    %v716 = vpack.c.b16 %v530, %v527
    %v717 = vpack.c.b16 %v531, %v528
    %v718 = vpack.c.b16 %v532, %v529
    %v719 = vpack.c.b16 %v536, %v533
    %v720 = vpack.c.b16 %v537, %v534
    %v721 = vpack.c.b16 %v538, %v535
    %v722 = vpack.c.b16 %v542, %v539
    %v723 = vpack.c.b16 %v543, %v540
    %v724 = vpack.c.b16 %v544, %v541
    %v725 = vpack.c.b16 %v548, %v545
    %v726 = vpack.c.b16 %v549, %v546
    %v727 = vpack.c.b16 %v550, %v547
    %v728 = vpack.c.b16 %v554, %v551
    %v729 = vpack.c.b16 %v555, %v552
    %v730 = vpack.c.b16 %v556, %v553
    %v731 = vpack.c.b16 %v560, %v557
    %v732 = vpack.c.b16 %v561, %v558
    %v733 = vpack.c.b16 %v562, %v559
    %v734 = vpack.c.b16 %v566, %v563
    %v735 = vpack.c.b16 %v567, %v564
    %v736 = vpack.c.b16 %v568, %v565
    %v737 = vpack.c.b16 %v572, %v569
    %v738 = vpack.c.b16 %v573, %v570
    %v739 = vpack.c.b16 %v574, %v571
    %v740 = vpack.c.b16 %v578, %v575
    %v741 = vpack.c.b16 %v579, %v576
    %v742 = vpack.c.b16 %v580, %v577
    %v743 = vpack.c.b16 %v584, %v581
    %v744 = vpack.c.b16 %v585, %v582
    %v745 = vpack.c.b16 %v586, %v583
    %v746 = vpack.c.b16 %v590, %v587
    %v747 = vpack.c.b16 %v591, %v588
    %v748 = vpack.c.b16 %v592, %v589
    %v749 = vpack.c.b16 %v596, %v593
    %v750 = vpack.c.b16 %v597, %v594
    %v751 = vpack.c.b16 %v598, %v595
    %v752 = vpack.c.b16 %v602, %v599
    %v753 = vpack.c.b16 %v603, %v600
    %v754 = vpack.c.b16 %v604, %v601
    %v755 = vpack.c.b16 %v608, %v605
    %v756 = vpack.c.b16 %v609, %v606
    %v757 = vpack.c.b16 %v610, %v607
    %v758 = vpack.c.b16 %v614, %v611
    %v759 = vpack.c.b16 %v615, %v612
    %v760 = vpack.c.b16 %v616, %v613
    %v761 = vpack.c.b16 %v620, %v617
    %v762 = vpack.c.b16 %v621, %v618
    %v763 = vpack.c.b16 %v622, %v619
    %v764 = vpack.c.b16 %v626, %v623
    %v765 = vpack.c.b16 %v627, %v624
    %v766 = vpack.c.b16 %v628, %v625
    %v767 = vpack.c.b16 %v632, %v629
    %v768 = vpack.c.b16 %v633, %v630
    %v769 = vpack.c.b16 %v634, %v631
    %v770 = vpack.c.b16 %v638, %v635
    %v771 = vpack.c.b16 %v639, %v636
    %v772 = vpack.c.b16 %v640, %v637
    %v773 = vpack.c.b16 %v644, %v641
    %v774 = vpack.c.b16 %v645, %v642
    %v775 = vpack.c.b16 %v646, %v643
    %v776 = vpack.c.b16 %v650, %v647
    %v777 = vpack.c.b16 %v651, %v648
    %v778 = vpack.c.b16 %v652, %v649
    %v779 = vpack.c.b16 %v656, %v653
    %v780 = vpack.c.b16 %v657, %v654
    %v781 = vpack.c.b16 %v658, %v655
    %v782 = vpack.c.b16 %v662, %v659
    %v783 = vpack.c.b16 %v663, %v660
    %v784 = vpack.c.b16 %v664, %v661
    %v785 = vpack.c.b16 %v668, %v665
    %v786 = vpack.c.b16 %v669, %v666
    %v787 = vpack.c.b16 %v670, %v667
    %v788 = vpack.c.b16 %v674, %v671
    %v789 = vpack.c.b16 %v675, %v672
    %v790 = vpack.c.b16 %v676, %v673
    %v791 = vpack.c.b16 %v680, %v677
    %v792 = vpack.c.b16 %v681, %v678
    %v793 = vpack.c.b16 %v682, %v679
    %v794 = vpack.c.b16 %v686, %v683
    %v795 = vpack.c.b16 %v687, %v684
    %v796 = vpack.c.b16 %v688, %v685
    %v797 = vpack.c.b16 %v692, %v689
    %v798 = vpack.c.b16 %v693, %v690
    %v799 = vpack.c.b16 %v694, %v691
    %v800 = vpack.c.b16 %v698, %v695
    %v801 = vpack.c.b16 %v699, %v696
    %v802 = vpack.c.b16 %v700, %v697
    %v803 = vpack.c.b16 %v704, %v701
    %v804 = vpack.c.b16 %v705, %v702
    %v805 = vpack.c.b16 %v706, %v703
    %v806 = vpack.c.b16 %v710, %v707
    %v807 = vpack.c.b16 %v711, %v708
    %v808 = vpack.c.b16 %v712, %v709
    %905 = vmatprep.subr.bf16.mxu0 %v714
    %906 = vmatpush1.bf16.msra.mxu0 %v713
    %907 = vmatprep.subr.bf16.mxu0 %v717
    %908 = vmatpush1.bf16.msra.mxu0 %v716
    %909 = vmatprep.subr.bf16.mxu0 %v720
    %910 = vmatpush1.bf16.msra.mxu0 %v719
    %911 = vmatprep.subr.bf16.mxu0 %v723
    %912 = vmatpush1.bf16.msra.mxu0 %v722
    %913 = vmatprep.subr.bf16.mxu0 %v726
    %914 = vmatpush1.bf16.msra.mxu0 %v725
    %915 = vmatprep.subr.bf16.mxu0 %v729
    %916 = vmatpush1.bf16.msra.mxu0 %v728
    %917 = vmatprep.subr.bf16.mxu0 %v732
    %918 = vmatpush1.bf16.msra.mxu0 %v731
    %919 = vmatprep.subr.bf16.mxu0 %v735
    %920 = vmatpush1.bf16.msra.mxu0 %v734
    %921 = vmatprep.subr.bf16.mxu0 %v738
    %922 = vmatpush1.bf16.msra.mxu0 %v737
    %923 = vmatprep.subr.bf16.mxu0 %v741
    %924 = vmatpush1.bf16.msra.mxu0 %v740
    %925 = vmatprep.subr.bf16.mxu0 %v744
    %926 = vmatpush1.bf16.msra.mxu0 %v743
    %927 = vmatprep.subr.bf16.mxu0 %v747
    %928 = vmatpush1.bf16.msra.mxu0 %v746
    %929 = vmatprep.subr.bf16.mxu0 %v750
    %930 = vmatpush1.bf16.msra.mxu0 %v749
    %931 = vmatprep.subr.bf16.mxu0 %v753
    %932 = vmatpush1.bf16.msra.mxu0 %v752
    %933 = vmatprep.subr.bf16.mxu0 %v756
    %934 = vmatpush1.bf16.msra.mxu0 %v755
    %935 = vmatprep.subr.bf16.mxu0 %v759
    %936 = vmatpush1.bf16.msra.mxu0 %v758
    %937 = vmatprep.mubr.bf16.mxu0 %v245
    %938 = vmatmul.mubr.bf16.gmra.mrb[0].mxu0 %v244
    %v939 = vpop.f32.mrb[0].mxu0
    %v940 = vadd.f32 %v381, %v939
    %v941 = vpop.f32.mrb[0].mxu0
    %v942 = vadd.f32 %v385, %v941
    %v943 = vpop.f32.mrb[0].mxu0
    %v944 = vpop.f32.mrb[0].mxu0
    %945 = vdwg.mxu0
    %946 = vmatprep.subr.bf16.mxu0 %v762
    %947 = vmatpush1.bf16.msra.mxu0 %v761
    %948 = vmatprep.subr.bf16.mxu0 %v765
    %949 = vmatpush1.bf16.msra.mxu0 %v764
    %950 = vmatprep.subr.bf16.mxu0 %v768
    %951 = vmatpush1.bf16.msra.mxu0 %v767
    %952 = vmatprep.subr.bf16.mxu0 %v771
    %953 = vmatpush1.bf16.msra.mxu0 %v770
    %954 = vmatprep.subr.bf16.mxu0 %v774
    %955 = vmatpush1.bf16.msra.mxu0 %v773
    %956 = vmatprep.subr.bf16.mxu0 %v777
    %957 = vmatpush1.bf16.msra.mxu0 %v776
    %958 = vmatprep.subr.bf16.mxu0 %v780
    %959 = vmatpush1.bf16.msra.mxu0 %v779
    %960 = vmatprep.subr.bf16.mxu0 %v783
    %961 = vmatpush1.bf16.msra.mxu0 %v782
    %962 = vmatprep.subr.bf16.mxu0 %v786
    %963 = vmatpush1.bf16.msra.mxu0 %v785
    %964 = vmatprep.subr.bf16.mxu0 %v789
    %965 = vmatpush1.bf16.msra.mxu0 %v788
    %966 = vmatprep.subr.bf16.mxu0 %v792
    %967 = vmatpush1.bf16.msra.mxu0 %v791
    %968 = vmatprep.subr.bf16.mxu0 %v795
    %969 = vmatpush1.bf16.msra.mxu0 %v794
    %970 = vmatprep.subr.bf16.mxu0 %v798
    %971 = vmatpush1.bf16.msra.mxu0 %v797
    %972 = vmatprep.subr.bf16.mxu0 %v801
    %973 = vmatpush1.bf16.msra.mxu0 %v800
    %974 = vmatprep.subr.bf16.mxu0 %v804
    %975 = vmatpush1.bf16.msra.mxu0 %v803
    %976 = vmatprep.subr.bf16.mxu0 %v807
    %977 = vmatpush1.bf16.msra.mxu0 %v806
    %978 = vmatprep.mubr.bf16.mxu0 %v247
    %979 = vmatmul.mubr.bf16.gmra.mrb[0].mxu0 %v246
    %v980 = vpop.f32.mrb[0].mxu0
    %v981 = vadd.f32 %v940, %v980
    %v982 = vpop.f32.mrb[0].mxu0
    %v983 = vadd.f32 %v942, %v982
    %v984 = vpop.f32.mrb[0].mxu0
    %v985 = vpop.f32.mrb[0].mxu0
    %986 = vdwg.mxu0
    %987 = vmatprep.subr.bf16.mxu0 0
    %988 = vmatpush1.bf16.msra.mxu0 %v715
    %989 = vmatprep.subr.bf16.mxu0 0
    %990 = vmatpush1.bf16.msra.mxu0 %v718
    %991 = vmatprep.subr.bf16.mxu0 0
    %992 = vmatpush1.bf16.msra.mxu0 %v721
    %993 = vmatprep.subr.bf16.mxu0 0
    %994 = vmatpush1.bf16.msra.mxu0 %v724
    %995 = vmatprep.subr.bf16.mxu0 0
    %996 = vmatpush1.bf16.msra.mxu0 %v727
    %997 = vmatprep.subr.bf16.mxu0 0
    %998 = vmatpush1.bf16.msra.mxu0 %v730
    %999 = vmatprep.subr.bf16.mxu0 0
    %1000 = vmatpush1.bf16.msra.mxu0 %v733
    %1001 = vmatprep.subr.bf16.mxu0 0
    %1002 = vmatpush1.bf16.msra.mxu0 %v736
    %1003 = vmatprep.subr.bf16.mxu0 0
    %1004 = vmatpush1.bf16.msra.mxu0 %v739
    %1005 = vmatprep.subr.bf16.mxu0 0
    %1006 = vmatpush1.bf16.msra.mxu0 %v742
    %1007 = vmatprep.subr.bf16.mxu0 0
    %1008 = vmatpush1.bf16.msra.mxu0 %v745
    %1009 = vmatprep.subr.bf16.mxu0 0
    %1010 = vmatpush1.bf16.msra.mxu0 %v748
    %1011 = vmatprep.subr.bf16.mxu0 0
    %1012 = vmatpush1.bf16.msra.mxu0 %v751
    %1013 = vmatprep.subr.bf16.mxu0 0
    %1014 = vmatpush1.bf16.msra.mxu0 %v754
    %1015 = vmatprep.subr.bf16.mxu0 0
    %1016 = vmatpush1.bf16.msra.mxu0 %v757
    %1017 = vmatprep.subr.bf16.mxu0 0
    %1018 = vmatpush1.bf16.msra.mxu0 %v760
    %1019 = vmatprep.mubr.bf16.mxu0 %v245
    %1020 = vmatmul.mubr.bf16.gmra.mrb[0].mxu0 %v244
    %v1021 = vpop.f32.mrb[0].mxu0
    %v1022 = vadd.f32 %v389, %v1021
    %v1023 = vpop.f32.mrb[0].mxu0
    %v1024 = vpop.f32.mrb[0].mxu0
    %v1025 = vpop.f32.mrb[0].mxu0
    %1026 = vdwg.mxu0
    %1027 = vmatprep.subr.bf16.mxu0 0
    %1028 = vmatpush1.bf16.msra.mxu0 %v763
    %1029 = vmatprep.subr.bf16.mxu0 0
    %1030 = vmatpush1.bf16.msra.mxu0 %v766
    %1031 = vmatprep.subr.bf16.mxu0 0
    %1032 = vmatpush1.bf16.msra.mxu0 %v769
    %1033 = vmatprep.subr.bf16.mxu0 0
    %1034 = vmatpush1.bf16.msra.mxu0 %v772
    %1035 = vmatprep.subr.bf16.mxu0 0
    %1036 = vmatpush1.bf16.msra.mxu0 %v775
    %1037 = vmatprep.subr.bf16.mxu0 0
    %1038 = vmatpush1.bf16.msra.mxu0 %v778
    %1039 = vmatprep.subr.bf16.mxu0 0
    %1040 = vmatpush1.bf16.msra.mxu0 %v781
    %1041 = vmatprep.subr.bf16.mxu0 0
    %1042 = vmatpush1.bf16.msra.mxu0 %v784
    %1043 = vmatprep.subr.bf16.mxu0 0
    %1044 = vmatpush1.bf16.msra.mxu0 %v787
    %1045 = vmatprep.subr.bf16.mxu0 0
    %1046 = vmatpush1.bf16.msra.mxu0 %v790
    %1047 = vmatprep.subr.bf16.mxu0 0
    %1048 = vmatpush1.bf16.msra.mxu0 %v793
    %1049 = vmatprep.subr.bf16.mxu0 0
    %1050 = vmatpush1.bf16.msra.mxu0 %v796
    %1051 = vmatprep.subr.bf16.mxu0 0
    %1052 = vmatpush1.bf16.msra.mxu0 %v799
    %1053 = vmatprep.subr.bf16.mxu0 0
    %1054 = vmatpush1.bf16.msra.mxu0 %v802
    %1055 = vmatprep.subr.bf16.mxu0 0
    %1056 = vmatpush1.bf16.msra.mxu0 %v805
    %1057 = vmatprep.subr.bf16.mxu0 0
    %1058 = vmatpush1.bf16.msra.mxu0 %v808
    %1059 = vmatprep.mubr.bf16.mxu0 %v247
    %1060 = vmatmul.mubr.bf16.gmra.mrb[0].mxu0 %v246
    %v1061 = vpop.f32.mrb[0].mxu0
    %v1062 = vadd.f32 %v1022, %v1061
    %v1063 = vpop.f32.mrb[0].mxu0
    %v1064 = vpop.f32.mrb[0].mxu0
    %v1065 = vpop.f32.mrb[0].mxu0
    %1066 = vdwg.mxu0
    %v1067 = vmax.f32 %v981, 0.0
    %v1068 = vmax.f32 %v983, 0.0
    %v1069 = vmax.f32 %v1062, 0.0
    %v1070 = vpack.c.bf16 %v1067, %v1067
    %v1071 = vpack.c.bf16 %v1068, %v1068
    %v1072 = vpack.c.bf16 %v1069, %v1069
    %v1073 = vld [vmem:[#allocation9] sm:$0xf]
    %v1074 = vld [vmem:[#allocation9 + $0x4] sm:$0xf]
    %v1075 = vld [vmem:[#allocation9 + $0x8] sm:$0xf]
    %v1076 = vld [vmem:[#allocation9 + $0xc] sm:$0xf]
    %v1077 = vld [vmem:[#allocation9 + $0x10] sm:$0xf]
    %v1078 = vld [vmem:[#allocation9 + $0x14] sm:$0xf]
    %v1079 = vld [vmem:[#allocation9 + $0x18] sm:$0xf]
    %v1080 = vld [vmem:[#allocation9 + $0x1c] sm:$0xf]
    %v1081 = vld [vmem:[#allocation9 + $0x20] sm:$0xf]
    %v1082 = vld [vmem:[#allocation9 + $0x24] sm:$0xf]
    %v1083 = vld [vmem:[#allocation9 + $0x28] sm:$0xf]
    %v1084 = vld [vmem:[#allocation9 + $0x2c] sm:$0xf]
    %v1085 = vld [vmem:[#allocation9 + $0x30] sm:$0xf]
    %v1086 = vld [vmem:[#allocation9 + $0x34] sm:$0xf]
    %v1087 = vld [vmem:[#allocation9 + $0x38] sm:$0xf]
    %v1088 = vld [vmem:[#allocation9 + $0x3c] sm:$0xf]
    %v1089 = vld [vmem:[#allocation9 + $0x40] sm:$0xf]
    %v1090 = vld [vmem:[#allocation9 + $0x44] sm:$0xf]
    %v1091 = vld [vmem:[#allocation9 + $0x48] sm:$0xf]
    %v1092 = vld [vmem:[#allocation9 + $0x4c] sm:$0xf]
    %v1093 = vld [vmem:[#allocation9 + $0x50] sm:$0xf]
    %v1094 = vld [vmem:[#allocation9 + $0x54] sm:$0xf]
    %v1095 = vld [vmem:[#allocation9 + $0x58] sm:$0xf]
    %v1096 = vld [vmem:[#allocation9 + $0x5c] sm:$0xf]
    %v1097 = vld [vmem:[#allocation9 + $0x60] sm:$0xf]
    %v1098 = vld [vmem:[#allocation9 + $0x64] sm:$0xf]
    %v1099 = vld [vmem:[#allocation9 + $0x68] sm:$0xf]
    %v1100 = vld [vmem:[#allocation9 + $0x6c] sm:$0xf]
    %v1101 = vld [vmem:[#allocation9 + $0x70] sm:$0xf]
    %v1102 = vld [vmem:[#allocation9 + $0x74] sm:$0xf]
    %v1103 = vld [vmem:[#allocation9 + $0x78] sm:$0xf]
    %v1104 = vld [vmem:[#allocation9 + $0x7c] sm:$0xf]
    %v1105 = vld [vmem:[#allocation9 + $0x80] sm:$0xf]
    %v1106 = vld [vmem:[#allocation9 + $0x84] sm:$0xf]
    %v1107 = vld [vmem:[#allocation9 + $0x88] sm:$0xf]
    %v1108 = vld [vmem:[#allocation9 + $0x8c] sm:$0xf]
    %v1109 = vld [vmem:[#allocation9 + $0x90] sm:$0xf]
    %v1110 = vld [vmem:[#allocation9 + $0x94] sm:$0xf]
    %v1111 = vld [vmem:[#allocation9 + $0x98] sm:$0xf]
    %v1112 = vld [vmem:[#allocation9 + $0x9c] sm:$0xf]
    %v1113 = vld [vmem:[#allocation9 + $0xa0] sm:$0xf]
    %v1114 = vld [vmem:[#allocation9 + $0xa4] sm:$0xf]
    %v1115 = vld [vmem:[#allocation9 + $0xa8] sm:$0xf]
    %v1116 = vld [vmem:[#allocation9 + $0xac] sm:$0xf]
    %v1117 = vld [vmem:[#allocation9 + $0xb0] sm:$0xf]
    %v1118 = vld [vmem:[#allocation9 + $0xb4] sm:$0xf]
    %v1119 = vld [vmem:[#allocation9 + $0xb8] sm:$0xf]
    %v1120 = vld [vmem:[#allocation9 + $0xbc] sm:$0xf]
    %s1121 = sld [smem:[#allocation2]]
    %v1122 = vstv %s1121
    %v1171 = vunpack.c.l.b16 %v1073
    %v1172 = vunpack.c.l.b16 %v1074
    %v1173 = vunpack.c.l.b16 %v1075
    %v1174 = vunpack.c.l.b16 %v1076
    %v1175 = vunpack.c.l.b16 %v1077
    %v1176 = vunpack.c.l.b16 %v1078
    %v1177 = vunpack.c.l.b16 %v1079
    %v1178 = vunpack.c.l.b16 %v1080
    %v1179 = vunpack.c.l.b16 %v1081
    %v1180 = vunpack.c.l.b16 %v1082
    %v1181 = vunpack.c.l.b16 %v1083
    %v1182 = vunpack.c.l.b16 %v1084
    %v1183 = vunpack.c.l.b16 %v1085
    %v1184 = vunpack.c.l.b16 %v1086
    %v1185 = vunpack.c.l.b16 %v1087
    %v1186 = vunpack.c.l.b16 %v1088
    %v1187 = vunpack.c.l.b16 %v1089
    %v1188 = vunpack.c.l.b16 %v1090
    %v1189 = vunpack.c.l.b16 %v1091
    %v1190 = vunpack.c.l.b16 %v1092
    %v1191 = vunpack.c.l.b16 %v1093
    %v1192 = vunpack.c.l.b16 %v1094
    %v1193 = vunpack.c.l.b16 %v1095
    %v1194 = vunpack.c.l.b16 %v1096
    %v1195 = vunpack.c.l.b16 %v1097
    %v1196 = vunpack.c.l.b16 %v1098
    %v1197 = vunpack.c.l.b16 %v1099
    %v1198 = vunpack.c.l.b16 %v1100
    %v1199 = vunpack.c.l.b16 %v1101
    %v1200 = vunpack.c.l.b16 %v1102
    %v1201 = vunpack.c.l.b16 %v1103
    %v1202 = vunpack.c.l.b16 %v1104
    %v1203 = vunpack.c.l.b16 %v1105
    %v1204 = vunpack.c.l.b16 %v1106
    %v1205 = vunpack.c.l.b16 %v1107
    %v1206 = vunpack.c.l.b16 %v1108
    %v1207 = vunpack.c.l.b16 %v1109
    %v1208 = vunpack.c.l.b16 %v1110
    %v1209 = vunpack.c.l.b16 %v1111
    %v1210 = vunpack.c.l.b16 %v1112
    %v1211 = vunpack.c.l.b16 %v1113
    %v1212 = vunpack.c.l.b16 %v1114
    %v1213 = vunpack.c.l.b16 %v1115
    %v1214 = vunpack.c.l.b16 %v1116
    %v1215 = vunpack.c.l.b16 %v1117
    %v1216 = vunpack.c.l.b16 %v1118
    %v1217 = vunpack.c.l.b16 %v1119
    %v1218 = vunpack.c.l.b16 %v1120
    %v1219 = vpack.c.b16 %v1172, %v1171
    %v1220 = vpack.c.b16 %v1174, %v1173
    %v1221 = vpack.c.b16 %v1176, %v1175
    %v1222 = vpack.c.b16 %v1178, %v1177
    %v1223 = vpack.c.b16 %v1180, %v1179
    %v1224 = vpack.c.b16 %v1182, %v1181
    %v1225 = vpack.c.b16 %v1184, %v1183
    %v1226 = vpack.c.b16 %v1186, %v1185
    %v1227 = vpack.c.b16 %v1188, %v1187
    %v1228 = vpack.c.b16 %v1190, %v1189
    %v1229 = vpack.c.b16 %v1192, %v1191
    %v1230 = vpack.c.b16 %v1194, %v1193
    %v1231 = vpack.c.b16 %v1196, %v1195
    %v1232 = vpack.c.b16 %v1198, %v1197
    %v1233 = vpack.c.b16 %v1200, %v1199
    %v1234 = vpack.c.b16 %v1202, %v1201
    %v1235 = vpack.c.b16 %v1204, %v1203
    %v1236 = vpack.c.b16 %v1206, %v1205
    %v1237 = vpack.c.b16 %v1208, %v1207
    %v1238 = vpack.c.b16 %v1210, %v1209
    %v1239 = vpack.c.b16 %v1212, %v1211
    %v1240 = vpack.c.b16 %v1214, %v1213
    %v1241 = vpack.c.b16 %v1216, %v1215
    %v1242 = vpack.c.b16 %v1218, %v1217
    %1267 = vmatprep.subr.bf16.mxu0 0
    %1268 = vmatpush1.bf16.msra.mxu0 %v1219
    %1269 = vmatprep.subr.bf16.mxu0 0
    %1270 = vmatpush1.bf16.msra.mxu0 %v1220
    %1271 = vmatprep.subr.bf16.mxu0 0
    %1272 = vmatpush1.bf16.msra.mxu0 %v1221
    %1273 = vmatprep.subr.bf16.mxu0 0
    %1274 = vmatpush1.bf16.msra.mxu0 %v1222
    %1275 = vmatprep.subr.bf16.mxu0 0
    %1276 = vmatpush1.bf16.msra.mxu0 %v1223
    %1277 = vmatprep.subr.bf16.mxu0 0
    %1278 = vmatpush1.bf16.msra.mxu0 %v1224
    %1279 = vmatprep.subr.bf16.mxu0 0
    %1280 = vmatpush1.bf16.msra.mxu0 %v1225
    %1281 = vmatprep.subr.bf16.mxu0 0
    %1282 = vmatpush1.bf16.msra.mxu0 %v1226
    %1283 = vmatprep.subr.bf16.mxu0 0
    %1284 = vmatpush1.bf16.msra.mxu0 %v1227
    %1285 = vmatprep.subr.bf16.mxu0 0
    %1286 = vmatpush1.bf16.msra.mxu0 %v1228
    %1287 = vmatprep.subr.bf16.mxu0 0
    %1288 = vmatpush1.bf16.msra.mxu0 %v1229
    %1289 = vmatprep.subr.bf16.mxu0 0
    %1290 = vmatpush1.bf16.msra.mxu0 %v1230
    %1291 = vmatprep.subr.bf16.mxu0 0
    %1292 = vmatpush1.bf16.msra.mxu0 %v1231
    %1293 = vmatprep.subr.bf16.mxu0 0
    %1294 = vmatpush1.bf16.msra.mxu0 %v1232
    %1295 = vmatprep.subr.bf16.mxu0 0
    %1296 = vmatpush1.bf16.msra.mxu0 %v1233
    %1297 = vmatprep.subr.bf16.mxu0 0
    %1298 = vmatpush1.bf16.msra.mxu0 %v1234
    %1299 = vmatprep.mubr.bf16.mxu0 %v1071
    %1300 = vmatmul.mubr.bf16.gmra.mrb[0].mxu0 %v1070
    %v1301 = vpop.f32.mrb[0].mxu0
    %v1302 = vadd.f32 %v1122, %v1301
    %v1303 = vpop.f32.mrb[0].mxu0
    %v1304 = vpop.f32.mrb[0].mxu0
    %v1305 = vpop.f32.mrb[0].mxu0
    %1306 = vdwg.mxu0
    %1307 = vmatprep.subr.bf16.mxu0 0
    %1308 = vmatpush1.bf16.msra.mxu0 %v1235
    %1309 = vmatprep.subr.bf16.mxu0 0
    %1310 = vmatpush1.bf16.msra.mxu0 %v1236
    %1311 = vmatprep.subr.bf16.mxu0 0
    %1312 = vmatpush1.bf16.msra.mxu0 %v1237
    %1313 = vmatprep.subr.bf16.mxu0 0
    %1314 = vmatpush1.bf16.msra.mxu0 %v1238
    %1315 = vmatprep.subr.bf16.mxu0 0
    %1316 = vmatpush1.bf16.msra.mxu0 %v1239
    %1317 = vmatprep.subr.bf16.mxu0 0
    %1318 = vmatpush1.bf16.msra.mxu0 %v1240
    %1319 = vmatprep.subr.bf16.mxu0 0
    %1320 = vmatpush1.bf16.msra.mxu0 %v1241
    %1321 = vmatprep.subr.bf16.mxu0 0
    %1322 = vmatpush1.bf16.msra.mxu0 %v1242
    %1323 = vmatprep.subr.bf16.mxu0 0
    %1324 = vmatpush1.bf16.msra.mxu0 0
    %1325 = vmatprep.subr.bf16.mxu0 0
    %1326 = vmatpush1.bf16.msra.mxu0 0
    %1327 = vmatprep.subr.bf16.mxu0 0
    %1328 = vmatpush1.bf16.msra.mxu0 0
    %1329 = vmatprep.subr.bf16.mxu0 0
    %1330 = vmatpush1.bf16.msra.mxu0 0
    %1331 = vmatprep.subr.bf16.mxu0 0
    %1332 = vmatpush1.bf16.msra.mxu0 0
    %1333 = vmatprep.subr.bf16.mxu0 0
    %1334 = vmatpush1.bf16.msra.mxu0 0
    %1335 = vmatprep.subr.bf16.mxu0 0
    %1336 = vmatpush1.bf16.msra.mxu0 0
    %1337 = vmatprep.subr.bf16.mxu0 0
    %1338 = vmatpush1.bf16.msra.mxu0 0
    %1339 = vmatprep.mubr.bf16.mxu0 0
    %1340 = vmatmul.mubr.bf16.gmra.mrb[0].mxu0 %v1072
    %v1341 = vpop.f32.mrb[0].mxu0
    %v1342 = vadd.f32 %v1302, %v1341
    %v1343 = vpop.f32.mrb[0].mxu0
    %v1344 = vpop.f32.mrb[0].mxu0
    %v1345 = vpop.f32.mrb[0].mxu0
    %1346 = vdwg.mxu0
    %1347 = vst [vmem:[#allocation11] sm:$0xff] %v1342
    // Predicated region
    $region46: #{tpu_custom_call.1} parent=1 // pred_check
      _
    $region47: #{tpu_custom_call.1} parent=1 // pred_check_branch
      %1349 = sbr.rel (0) target = $region49
    $region48: #{tpu_custom_call.1} parent=1 // pred_region
      %s1351 = ssub.s32 128, 128
      %1352 = vsyncadd [#allocation5], %s1351
      %s1354 = sshll.u32 [#allocation11], 4
      %s1355 = int_to_ptr.vmem [resolvable:$true] %s1354
      %1357 = dma.vmem_to_hbm [thread:$0]  %s1355, 128, %s7, [#allocation5]
    $region49: #{tpu_custom_call.1} parent=1 // pred_fallthru
      _
    // Predicated region
    $region50: #{tpu_custom_call.1} parent=1 // pred_check
      _
    $region51: #{tpu_custom_call.1} parent=1 // pred_check_branch
      %1359 = sbr.rel (0) target = $region53
    $region52: #{tpu_custom_call.1} parent=1 // pred_region
      %1360 = dma.done [#allocation5], 128
    $region53: #{tpu_custom_call.1} parent=1 // pred_fallthru
      _
    %1361 = vsyncpa [#allocation4], 1
    %1362 = vsyncpa [#allocation7], 1
    %1363 = vsyncpa [#allocation10], 1
    %1364 = vsyncpa [#allocation5], 1

</llo_original>
